<compile_context>
chip_gen: v7x
topology: tpu7x:2x2x1
jax: 0.10.0
libtpu: 0.0.40
codegen_flags: <defaults>
</compile_context>

<pallas_src>
import functools

import jax
import jax.numpy as jnp
from jax import lax
from jax.experimental import pallas as pl
from jax.experimental.pallas import tpu as pltpu

LANE = 128
SUBLANE = 8


def _round_up(x, m):
    return (x + m - 1) // m * m


# -----------------------------------------------------------------------------
# Kernel
# -----------------------------------------------------------------------------
def deeponet_kernel(br_ref, tr_ref, w_ref, b_ref, bias_ref, out_ref, x_sc,
                    *, B, T, bdim, tdim, b_pad, t_pad, fpad):
    # br_ref  : [B, bdim]              raw branch input (VMEM, full array)
    # tr_ref  : [T, tdim]              raw trunk input (VMEM, full array)
    # w_ref   : [3*two_f, two_f]       packed W1c ; W2c ; W3c (zero-padded)
    # b_ref   : [8, two_f]             rows 0..2 = b1c, b2c, b3c
    # bias_ref: [1] (SMEM)             final scalar bias
    # out_ref : [b_pad, t_pad]         small padded output (masked store)
    # x_sc    : [b_pad + t_pad, two_f] VMEM scratch: fused input slab
    two_f = 2 * fpad
    rows = b_pad + t_pad

    # Build the fused input slab in-kernel.  Zeroing is mandatory: stale VMEM
    # could hold NaN/Inf which 0-weights do not kill (0 * NaN = NaN).
    # Branch rows carry features in cols 0:bdim, trunk rows in cols 0:tdim
    # (both at lane offset 0 -> cheap aligned masked stores); W1c routes each
    # row group into its own column half.
    x_sc[...] = jnp.zeros_like(x_sc)
    x_sc[0:B, 0:bdim] = br_ref[...]
    x_sc[b_pad:b_pad + T, 0:tdim] = tr_ref[...]
    x = x_sc[...]

    w1 = w_ref[0 * two_f:1 * two_f, :]
    w2 = w_ref[1 * two_f:2 * two_f, :]
    w3 = w_ref[2 * two_f:3 * two_f, :]
    b1 = b_ref[0:1, :]
    b2 = b_ref[1:2, :]
    b3 = b_ref[2:3, :]

    # Fused branch+trunk MLP: three lane-dense [rows,128] x [128,128] matmuls.
    # Branch rows keep their signal in cols 0:fpad, trunk rows in cols
    # fpad:two_f; cross-talk is confined to the half that is never read.
    h = jnp.maximum(jnp.dot(x, w1, preferred_element_type=jnp.float32) + b1, 0.0)
    h = jnp.maximum(jnp.dot(h, w2, preferred_element_type=jnp.float32) + b2, 0.0)
    y = jnp.dot(h, w3, preferred_element_type=jnp.float32) + b3   # [rows, two_f]

    branch_out = y[0:b_pad, 0:fpad]                 # [b_pad, fpad]
    trunk_out = y[b_pad:rows, fpad:two_f]           # [t_pad, fpad]

    # branch_out @ trunk_out.T via dot_general contracting dim 1 of both
    # operands; at these tile sizes any implicit transpose/relayout is a few
    # vregs of XLU filler.
    out_ref[...] = lax.dot_general(
        branch_out, trunk_out,
        dimension_numbers=(((1,), (1,)), ((), ())),
        preferred_element_type=jnp.float32,
    ) + bias_ref[0]


# -----------------------------------------------------------------------------
# Parameter packing (done once, outside the per-call path)
# -----------------------------------------------------------------------------
def pack_params(params, branch_input_dim, trunk_input_dim, hidden_dim, output_dim):
    # Per-net feature pad: smallest multiple of 64 covering every per-net dim,
    # so the fused width two_f = 2*fpad is a multiple of 128 (lane-dense).
    # Defaults (hidden=output=64) give fpad=64, two_f=128: one lane tile.
    max_dim = max(branch_input_dim, trunk_input_dim, hidden_dim, output_dim)
    fpad = _round_up(max_dim, LANE // 2)
    two_f = 2 * fpad

    # Layer 1: both nets' input features live at input cols 0:*, so bw1 and
    # tw1 occupy OVERLAPPING row ranges but disjoint column halves.  The
    # resulting cross terms land in the unread half of the other row group.
    w1c = jnp.zeros((two_f, two_f), jnp.float32)
    w1c = w1c.at[0:branch_input_dim, 0:hidden_dim].set(params["bw1"])
    w1c = w1c.at[0:trunk_input_dim, fpad:fpad + hidden_dim].set(params["tw1"])

    def blockdiag(wb, wt):
        rb, cb = wb.shape
        rt, ct = wt.shape
        m = jnp.zeros((two_f, two_f), jnp.float32)
        m = m.at[0:rb, 0:cb].set(wb)
        m = m.at[fpad:fpad + rt, fpad:fpad + ct].set(wt)
        return m

    w2c = blockdiag(params["bw2"], params["tw2"])
    w3c = blockdiag(params["bw3"], params["tw3"])
    w_slab = jnp.concatenate([w1c, w2c, w3c], axis=0)        # [3*two_f, two_f]

    def bias_row(bb, bt):
        r = jnp.zeros((two_f,), jnp.float32)
        r = r.at[0:bb.size].set(bb.reshape(-1))
        r = r.at[fpad:fpad + bt.size].set(bt.reshape(-1))
        return r

    b_slab = jnp.zeros((SUBLANE, two_f), jnp.float32)
    b_slab = b_slab.at[0].set(bias_row(params["bb1"], params["tb1"]))
    b_slab = b_slab.at[1].set(bias_row(params["bb2"], params["tb2"]))
    b_slab = b_slab.at[2].set(bias_row(params["bb3"], params["tb3"]))

    return dict(w=w_slab, b=b_slab, bias=params["bias"], fpad=fpad)


# -----------------------------------------------------------------------------
# Forward wrapper
# -----------------------------------------------------------------------------
def deeponet_forward(branch_input, trunk_input, packed):
    B, bdim = branch_input.shape
    T, tdim = trunk_input.shape
    fpad = packed["fpad"]
    two_f = 2 * fpad

    b_pad = _round_up(max(B, SUBLANE), SUBLANE)
    t_pad = _round_up(max(T, SUBLANE), SUBLANE)   # only 8-row pad; no 128-lane MLP padding
    rows = b_pad + t_pad

    kernel = functools.partial(
        deeponet_kernel, B=B, T=T, bdim=bdim, tdim=tdim,
        b_pad=b_pad, t_pad=t_pad, fpad=fpad)

    vmem = pl.BlockSpec(memory_space=pltpu.MemorySpace.VMEM)
    smem = pl.BlockSpec(memory_space=pltpu.MemorySpace.SMEM)

    out_pad = pl.pallas_call(
        kernel,
        out_shape=jax.ShapeDtypeStruct((b_pad, t_pad), jnp.float32),
        in_specs=[vmem, vmem, vmem, vmem, smem],
        out_specs=vmem,
        scratch_shapes=[pltpu.VMEM((rows, two_f), jnp.float32)],
    )(branch_input, trunk_input, packed["w"], packed["b"], packed["bias"])

    return out_pad[:B, :T]


# -----------------------------------------------------------------------------
# Init + pure-JAX reference
# -----------------------------------------------------------------------------
def init_params(key, branch_input_dim, trunk_input_dim, hidden_dim, output_dim):
    """PyTorch-like uniform fan-in init. Weights stored (in, out); bias (1, out)."""
    def linear(k, fan_in, fan_out):
        kw, kb = jax.random.split(k)
        bound = 1.0 / jnp.sqrt(fan_in)
        w = jax.random.uniform(kw, (fan_in, fan_out), jnp.float32, -bound, bound)
        b = jax.random.uniform(kb, (1, fan_out), jnp.float32, -bound, bound)
        return w, b

    keys = jax.random.split(key, 6)
    bw1, bb1 = linear(keys[0], branch_input_dim, hidden_dim)
    bw2, bb2 = linear(keys[1], hidden_dim, hidden_dim)
    bw3, bb3 = linear(keys[2], hidden_dim, output_dim)
    tw1, tb1 = linear(keys[3], trunk_input_dim, hidden_dim)
    tw2, tb2 = linear(keys[4], hidden_dim, hidden_dim)
    tw3, tb3 = linear(keys[5], hidden_dim, output_dim)
    bias = jnp.zeros((1,), jnp.float32)  # nn.Parameter(torch.zeros(1))
    return dict(bw1=bw1, bb1=bb1, bw2=bw2, bb2=bb2, bw3=bw3, bb3=bb3,
                tw1=tw1, tb1=tb1, tw2=tw2, tb2=tb2, tw3=tw3, tb3=tb3,
                bias=bias)


def reference_forward(branch_input, trunk_input, p):
    def mlp(x, w1, b1, w2, b2, w3, b3):
        h = jnp.maximum(x @ w1 + b1, 0.0)
        h = jnp.maximum(h @ w2 + b2, 0.0)
        return h @ w3 + b3
    bo = mlp(branch_input, p["bw1"], p["bb1"], p["bw2"], p["bb2"], p["bw3"], p["bb3"])
    to = mlp(trunk_input, p["tw1"], p["tb1"], p["tw2"], p["tb2"], p["tw3"], p["tb3"])
    return bo @ to.T + p["bias"][0]


# -----------------------------------------------------------------------------
if __name__ == "__main__":
    # Small shapes consistent with the module's 2-D (torch.mm) forward path.
    B = 8                   # branch samples
    T = 16                  # trunk query points
    branch_input_dim = 16
    trunk_input_dim = 8
    hidden_dim = 64         # module defaults
    output_dim = 64

    key = jax.random.PRNGKey(0)
    kp, kb, kt = jax.random.split(key, 3)

    params = init_params(kp, branch_input_dim, trunk_input_dim, hidden_dim, output_dim)
    packed = pack_params(params, branch_input_dim, trunk_input_dim, hidden_dim, output_dim)

    branch_input = jax.random.normal(kb, (B, branch_input_dim), jnp.float32)
    trunk_input = jax.random.normal(kt, (T, trunk_input_dim), jnp.float32)

    out = deeponet_forward(branch_input, trunk_input, packed)
    out = jax.block_until_ready(out)

    ref = reference_forward(branch_input, trunk_input, params)
    assert out.shape == (B, T)
    assert jnp.allclose(out, ref, atol=1e-4, rtol=1e-4), \
        f"max abs err = {jnp.max(jnp.abs(out - ref))}"

    print("KERNEL_OK")
</pallas_src>

<mosaic_0001>
module attributes {stable_mosaic.version = 11 : i64} {
  func.func @deeponet_kernel(%arg0: memref<8x16xf32, #tpu.memory_space<vmem>>, %arg1: memref<16x8xf32, #tpu.memory_space<vmem>>, %arg2: memref<384x128xf32, #tpu.memory_space<vmem>>, %arg3: memref<8x128xf32, #tpu.memory_space<vmem>>, %arg4: memref<1xf32, #tpu.memory_space<smem>>, %arg5: memref<8x16xf32, #tpu.memory_space<vmem>>, %arg6: memref<24x128xf32, #tpu.memory_space<vmem>>) attributes {dimension_semantics = [], scalar_prefetch = 0 : i64, scratch_operands = 1 : i64, tpu.core_type = #tpu.core_type<tc>} {
    %cst = arith.constant 0.000000e+00 : f32
    %0 = vector.broadcast %cst : f32 to vector<24x128xf32>
    %c0 = arith.constant 0 : index
    %c0_0 = arith.constant 0 : index
    %1 = vector.load %arg6[%c0, %c0_0] : memref<24x128xf32, #tpu.memory_space<vmem>>, vector<24x128xf32>
    tpu.vector_store %arg6[%c0, %c0_0], %0 {strides = array<i32>} : memref<24x128xf32, #tpu.memory_space<vmem>>, vector<24x128xf32>,
    %c0_1 = arith.constant 0 : index
    %c0_2 = arith.constant 0 : index
    %2 = vector.load %arg0[%c0_1, %c0_2] : memref<8x16xf32, #tpu.memory_space<vmem>>, vector<8x16xf32>
    %c0_3 = arith.constant 0 : index
    %c0_4 = arith.constant 0 : index
    %3 = vector.load %arg6[%c0_3, %c0_4] : memref<24x128xf32, #tpu.memory_space<vmem>>, vector<8x16xf32>
    tpu.vector_store %arg6[%c0_3, %c0_4], %2 {strides = array<i32>} : memref<24x128xf32, #tpu.memory_space<vmem>>, vector<8x16xf32>,
    %c0_5 = arith.constant 0 : index
    %c0_6 = arith.constant 0 : index
    %4 = vector.load %arg1[%c0_5, %c0_6] : memref<16x8xf32, #tpu.memory_space<vmem>>, vector<16x8xf32>
    %c8 = arith.constant 8 : index
    %c0_7 = arith.constant 0 : index
    %5 = vector.load %arg6[%c8, %c0_7] : memref<24x128xf32, #tpu.memory_space<vmem>>, vector<16x8xf32>
    tpu.vector_store %arg6[%c8, %c0_7], %4 {strides = array<i32>} : memref<24x128xf32, #tpu.memory_space<vmem>>, vector<16x8xf32>,
    %c0_8 = arith.constant 0 : index
    %c0_9 = arith.constant 0 : index
    %6 = vector.load %arg6[%c0_8, %c0_9] : memref<24x128xf32, #tpu.memory_space<vmem>>, vector<24x128xf32>
    %c0_10 = arith.constant 0 : index
    %c0_11 = arith.constant 0 : index
    %7 = vector.load %arg2[%c0_10, %c0_11] : memref<384x128xf32, #tpu.memory_space<vmem>>, vector<128x128xf32>
    %c128 = arith.constant 128 : index
    %c0_12 = arith.constant 0 : index
    %8 = vector.load %arg2[%c128, %c0_12] : memref<384x128xf32, #tpu.memory_space<vmem>>, vector<128x128xf32>
    %c256 = arith.constant 256 : index
    %c0_13 = arith.constant 0 : index
    %9 = vector.load %arg2[%c256, %c0_13] : memref<384x128xf32, #tpu.memory_space<vmem>>, vector<128x128xf32>
    %c0_14 = arith.constant 0 : index
    %c0_15 = arith.constant 0 : index
    %10 = vector.load %arg3[%c0_14, %c0_15] : memref<8x128xf32, #tpu.memory_space<vmem>>, vector<1x128xf32>
    %c1 = arith.constant 1 : index
    %c0_16 = arith.constant 0 : index
    %11 = vector.load %arg3[%c1, %c0_16] : memref<8x128xf32, #tpu.memory_space<vmem>>, vector<1x128xf32>
    %c2 = arith.constant 2 : index
    %c0_17 = arith.constant 0 : index
    %12 = vector.load %arg3[%c2, %c0_17] : memref<8x128xf32, #tpu.memory_space<vmem>>, vector<1x128xf32>
    %cst_18 = arith.constant dense<0.000000e+00> : vector<24x128xf32>
    %13 = tpu.matmul %6, %7, %cst_18 {dimension_numbers = #tpu.dot_dimension_numbers<[1], [0], [0], [1], [0, 0, 1, 1], [], []>} : vector<24x128xf32>, vector<128x128xf32>, vector<24x128xf32> -> vector<24x128xf32>
    %14 = vector.broadcast %10 : vector<1x128xf32> to vector<24x128xf32>
    %15 = arith.addf %13, %14 : vector<24x128xf32>
    %cst_19 = arith.constant 0.000000e+00 : f32
    %16 = vector.broadcast %cst_19 : f32 to vector<24x128xf32>
    %17 = arith.maximumf %15, %16 : vector<24x128xf32>
    %cst_20 = arith.constant dense<0.000000e+00> : vector<24x128xf32>
    %18 = tpu.matmul %17, %8, %cst_20 {dimension_numbers = #tpu.dot_dimension_numbers<[1], [0], [0], [1], [0, 0, 1, 1], [], []>} : vector<24x128xf32>, vector<128x128xf32>, vector<24x128xf32> -> vector<24x128xf32>
    %19 = vector.broadcast %11 : vector<1x128xf32> to vector<24x128xf32>
    %20 = arith.addf %18, %19 : vector<24x128xf32>
    %cst_21 = arith.constant 0.000000e+00 : f32
    %21 = vector.broadcast %cst_21 : f32 to vector<24x128xf32>
    %22 = arith.maximumf %20, %21 : vector<24x128xf32>
    %cst_22 = arith.constant dense<0.000000e+00> : vector<24x128xf32>
    %23 = tpu.matmul %22, %9, %cst_22 {dimension_numbers = #tpu.dot_dimension_numbers<[1], [0], [0], [1], [0, 0, 1, 1], [], []>} : vector<24x128xf32>, vector<128x128xf32>, vector<24x128xf32> -> vector<24x128xf32>
    %24 = vector.broadcast %12 : vector<1x128xf32> to vector<24x128xf32>
    %25 = arith.addf %23, %24 : vector<24x128xf32>
    %26 = vector.extract_strided_slice %25 {offsets = [0, 0], sizes = [8, 64], strides = [1, 1]} : vector<24x128xf32> to vector<8x64xf32>
    %27 = vector.extract_strided_slice %25 {offsets = [8, 64], sizes = [16, 64], strides = [1, 1]} : vector<24x128xf32> to vector<16x64xf32>
    %cst_23 = arith.constant dense<0.000000e+00> : vector<8x16xf32>
    %28 = tpu.matmul %26, %27, %cst_23 {dimension_numbers = #tpu.dot_dimension_numbers<[1], [1], [0], [0], [0, 0, 1, 0], [], []>} : vector<8x64xf32>, vector<16x64xf32>, vector<8x16xf32> -> vector<8x16xf32>
    %c0_24 = arith.constant 0 : index
    %29 = memref.load %arg4[%c0_24] : memref<1xf32, #tpu.memory_space<smem>>
    %30 = vector.broadcast %29 : f32 to vector<8x16xf32>
    %31 = arith.addf %28, %30 : vector<8x16xf32>
    %c0_25 = arith.constant 0 : index
    %c0_26 = arith.constant 0 : index
    %32 = vector.load %arg5[%c0_25, %c0_26] : memref<8x16xf32, #tpu.memory_space<vmem>>, vector<8x16xf32>
    tpu.vector_store %arg5[%c0_25, %c0_26], %31 {strides = array<i32>} : memref<8x16xf32, #tpu.memory_space<vmem>>, vector<8x16xf32>,
    return
  }
}

</mosaic_0001>

<llo_original>
// kernel: tpu_custom_call.1
$region0: #{tpu_custom_call.1}
  #allocation0 [shape = 'u32[]', space=smem, size = 0x4, offset = 0x4, fixed_abs, tag = 'smem constant byte address 0x4 - core index']
  #allocation1 [shape = 'u32[144,128]{1,0:T(1,128)}', space=vmem, size = 0x12000, scoped, tag = 'internal scratch']
  #allocation2 [shape = 'f32[24,128]{1,0:T(8,128)}', space=vmem, size = 0x3000, scoped, tag = 'scratch operand']
  #allocation3 [shape = 'f32[1]{0:T(128)S(6)}', space=smem, size = 0x200, scoped, tag = 'scoped memory for tpu_custom_call.1']
  %s0 = inlined_call_operand.vmem [shape: f32[8,16], index: 0, kind: input, shape index: {}]
  %s1 = inlined_call_operand.vmem [shape: f32[16,8], index: 1, kind: input, shape index: {}]
  %s2 = inlined_call_operand.hbm [shape: f32[384,128], index: 2, kind: input, shape index: {}]
  %s3 = inlined_call_operand.vmem [shape: f32[8,128], index: 3, kind: input, shape index: {}]
  %s4 = inlined_call_operand.<no memory space> [shape: f32[1], index: 4, kind: input, shape index: {}]
  %s5 = inlined_call_operand.hbm [shape: f32[8,16], index: 5, kind: output, shape index: {}]
  %s6 = sld [smem:[#allocation0]]
  $region34: #{tpu_custom_call.1} parent=0
    _
  %s8 = ssub.s32 1, %s6
  %s9 = scalar_select 0, %s8, %s6
  %10 = sst [smem:[#allocation3]] %s4
  $region1: #{tpu_custom_call.1} parent=0
    #allocation4 [shape = 'u8[196608]{0}', space=vmem, size = 0x30000, scoped, tag = 'input window, operand 2, single buffered']
    #allocation5 [shape = 's32[1]{0}', space=sflag, size = 0x4, scoped, tag = 'scoped memory for tpu_custom_call.1']
    #allocation6 [shape = 's32[1]{0}', space=sflag, size = 0x4, scoped, tag = 'scoped memory for tpu_custom_call.1']
    #allocation7 [shape = 'u8[4096]{0}', space=vmem, size = 0x1000, scoped, tag = 'output window, operand 0, single buffered']
    %11 = vsyncpa [#allocation5], 0
    %12 = vsyncpa [#allocation6], 0
    // Predicated region
    $region2: #{tpu_custom_call.1} parent=1 // pred_check
      _
    $region3: #{tpu_custom_call.1} parent=1 // pred_check_branch
      %14 = sbr.rel (0) target = $region5
    $region4: #{tpu_custom_call.1} parent=1 // pred_region
      _
    $region5: #{tpu_custom_call.1} parent=1 // pred_fallthru
      _
    // Predicated region
    $region6: #{tpu_custom_call.1} parent=1 // pred_check
      _
    $region7: #{tpu_custom_call.1} parent=1 // pred_check_branch
      %16 = sbr.rel (0) target = $region9
    $region8: #{tpu_custom_call.1} parent=1 // pred_region
      _
    $region9: #{tpu_custom_call.1} parent=1 // pred_fallthru
      _
    // Predicated region
    $region10: #{tpu_custom_call.1} parent=1 // pred_check
      _
    $region11: #{tpu_custom_call.1} parent=1 // pred_check_branch
      %18 = sbr.rel (0) target = $region13
    $region12: #{tpu_custom_call.1} parent=1 // pred_region
      %s20 = ssub.s32 6144, 6144
      %21 = vsyncadd [#allocation5], %s20
      %s22 = sshll.u32 [#allocation4], 4
      %s23 = int_to_ptr.vmem [resolvable:$true] %s22
      %28 = dma.hbm_to_vmem [thread:$0]  %s2, 6144, %s23, [#allocation5], 128, 128, 8
    $region13: #{tpu_custom_call.1} parent=1 // pred_fallthru
      _
    // Predicated region
    $region14: #{tpu_custom_call.1} parent=1 // pred_check
      _
    $region15: #{tpu_custom_call.1} parent=1 // pred_check_branch
      %30 = sbr.rel (0) target = $region17
    $region16: #{tpu_custom_call.1} parent=1 // pred_region
      _
    $region17: #{tpu_custom_call.1} parent=1 // pred_fallthru
      _
    // Predicated region
    $region18: #{tpu_custom_call.1} parent=1 // pred_check
      _
    $region19: #{tpu_custom_call.1} parent=1 // pred_check_branch
      %32 = sbr.rel (0) target = $region21
    $region20: #{tpu_custom_call.1} parent=1 // pred_region
      _
    $region21: #{tpu_custom_call.1} parent=1 // pred_fallthru
      _
    // Predicated region
    $region22: #{tpu_custom_call.1} parent=1 // pred_check
      _
    $region23: #{tpu_custom_call.1} parent=1 // pred_check_branch
      %34 = sbr.rel (0) target = $region25
    $region24: #{tpu_custom_call.1} parent=1 // pred_region
      %35 = dma.done [#allocation5], 6144
    $region25: #{tpu_custom_call.1} parent=1 // pred_fallthru
      _
    %36 = vst [vmem:[#allocation2] sm:$0xff] 0.0
    %37 = vst [vmem:[#allocation2 + $0x8] sm:$0xff] 0.0
    %38 = vst [vmem:[#allocation2 + $0x10] sm:$0xff] 0.0
    %v39 = vld [vmem:[%s0] sm:$0xff]
    %vm40 = vcmask 130048
    %41 = vst.msk [vmem:[#allocation2] sm:$0xff] %vm40, %v39
    %v42 = vld [vmem:[%s1] sm:$0xff]
    %v43 = vld [vmem:[%s1 + $0x8] sm:$0xff]
    %vm44 = vcmask 64512
    %45 = vst.msk [vmem:[#allocation2 + $0x8] sm:$0xff] %vm44, %v42
    %46 = vst.msk [vmem:[#allocation2 + $0x10] sm:$0xff] %vm44, %v43
    %v47 = vld [vmem:[#allocation2] sm:$0xff]
    %v48 = vld [vmem:[#allocation2 + $0x8] sm:$0xff]
    %v49 = vld [vmem:[#allocation2 + $0x10] sm:$0xff]
    %v50 = vld [vmem:[#allocation4] sm:$0xff]
    %v51 = vld [vmem:[#allocation4 + $0x8] sm:$0xff]
    %v52 = vld [vmem:[#allocation4 + $0x10] sm:$0xff]
    %v53 = vld [vmem:[#allocation4 + $0x18] sm:$0xff]
    %v54 = vld [vmem:[#allocation4 + $0x20] sm:$0xff]
    %v55 = vld [vmem:[#allocation4 + $0x28] sm:$0xff]
    %v56 = vld [vmem:[#allocation4 + $0x30] sm:$0xff]
    %v57 = vld [vmem:[#allocation4 + $0x38] sm:$0xff]
    %v58 = vld [vmem:[#allocation4 + $0x40] sm:$0xff]
    %v59 = vld [vmem:[#allocation4 + $0x48] sm:$0xff]
    %v60 = vld [vmem:[#allocation4 + $0x50] sm:$0xff]
    %v61 = vld [vmem:[#allocation4 + $0x58] sm:$0xff]
    %v62 = vld [vmem:[#allocation4 + $0x60] sm:$0xff]
    %v63 = vld [vmem:[#allocation4 + $0x68] sm:$0xff]
    %v64 = vld [vmem:[#allocation4 + $0x70] sm:$0xff]
    %v65 = vld [vmem:[#allocation4 + $0x78] sm:$0xff]
    %v66 = vld [vmem:[#allocation4 + $0x80] sm:$0xff]
    %v67 = vld [vmem:[#allocation4 + $0x88] sm:$0xff]
    %v68 = vld [vmem:[#allocation4 + $0x90] sm:$0xff]
    %v69 = vld [vmem:[#allocation4 + $0x98] sm:$0xff]
    %v70 = vld [vmem:[#allocation4 + $0xa0] sm:$0xff]
    %v71 = vld [vmem:[#allocation4 + $0xa8] sm:$0xff]
    %v72 = vld [vmem:[#allocation4 + $0xb0] sm:$0xff]
    %v73 = vld [vmem:[#allocation4 + $0xb8] sm:$0xff]
    %v74 = vld [vmem:[#allocation4 + $0xc0] sm:$0xff]
    %v75 = vld [vmem:[#allocation4 + $0xc8] sm:$0xff]
    %v76 = vld [vmem:[#allocation4 + $0xd0] sm:$0xff]
    %v77 = vld [vmem:[#allocation4 + $0xd8] sm:$0xff]
    %v78 = vld [vmem:[#allocation4 + $0xe0] sm:$0xff]
    %v79 = vld [vmem:[#allocation4 + $0xe8] sm:$0xff]
    %v80 = vld [vmem:[#allocation4 + $0xf0] sm:$0xff]
    %v81 = vld [vmem:[#allocation4 + $0xf8] sm:$0xff]
    %v82 = vld [vmem:[#allocation4 + $0x100] sm:$0xff]
    %v83 = vld [vmem:[#allocation4 + $0x108] sm:$0xff]
    %v84 = vld [vmem:[#allocation4 + $0x110] sm:$0xff]
    %v85 = vld [vmem:[#allocation4 + $0x118] sm:$0xff]
    %v86 = vld [vmem:[#allocation4 + $0x120] sm:$0xff]
    %v87 = vld [vmem:[#allocation4 + $0x128] sm:$0xff]
    %v88 = vld [vmem:[#allocation4 + $0x130] sm:$0xff]
    %v89 = vld [vmem:[#allocation4 + $0x138] sm:$0xff]
    %v90 = vld [vmem:[#allocation4 + $0x140] sm:$0xff]
    %v91 = vld [vmem:[#allocation4 + $0x148] sm:$0xff]
    %v92 = vld [vmem:[#allocation4 + $0x150] sm:$0xff]
    %v93 = vld [vmem:[#allocation4 + $0x158] sm:$0xff]
    %v94 = vld [vmem:[#allocation4 + $0x160] sm:$0xff]
    %v95 = vld [vmem:[#allocation4 + $0x168] sm:$0xff]
    %v96 = vld [vmem:[#allocation4 + $0x170] sm:$0xff]
    %v97 = vld [vmem:[#allocation4 + $0x178] sm:$0xff]
    %v98 = vld [vmem:[%s3] sm:$0x1]
    %v99 = vld [vmem:[%s3 + $0x1] sm:$0x1]
    %v100 = vld [vmem:[%s3 + $0x2] sm:$0x1]
    %v101 = vlaneseq
    %v102 = vshrl.u32 %v101, 7
    %v103 = vsub.s32 0, %v102
    %v104 = vrot.slane %v98, %v103
    %105 = vmatprep.subr.mxu0 0.0
    %106 = vmatpush1.msra.mxu0 %v50
    %107 = vmatprep.subr.mxu0 0.0
    %108 = vmatpush1.msra.mxu0 %v51
    %109 = vmatprep.subr.mxu0 0.0
    %110 = vmatpush1.msra.mxu0 %v52
    %111 = vmatprep.subr.mxu0 0.0
    %112 = vmatpush1.msra.mxu0 %v53
    %113 = vmatprep.subr.mxu0 0.0
    %114 = vmatpush1.msra.mxu0 %v54
    %115 = vmatprep.subr.mxu0 0.0
    %116 = vmatpush1.msra.mxu0 %v55
    %117 = vmatprep.subr.mxu0 0.0
    %118 = vmatpush1.msra.mxu0 %v56
    %119 = vmatprep.subr.mxu0 0.0
    %120 = vmatpush1.msra.mxu0 %v57
    %121 = vmatprep.subr.mxu0 0.0
    %122 = vmatpush1.msra.mxu0 %v58
    %123 = vmatprep.subr.mxu0 0.0
    %124 = vmatpush1.msra.mxu0 %v59
    %125 = vmatprep.subr.mxu0 0.0
    %126 = vmatpush1.msra.mxu0 %v60
    %127 = vmatprep.subr.mxu0 0.0
    %128 = vmatpush1.msra.mxu0 %v61
    %129 = vmatprep.subr.mxu0 0.0
    %130 = vmatpush1.msra.mxu0 %v62
    %131 = vmatprep.subr.mxu0 0.0
    %132 = vmatpush1.msra.mxu0 %v63
    %133 = vmatprep.subr.mxu0 0.0
    %134 = vmatpush1.msra.mxu0 %v64
    %135 = vmatprep.subr.mxu0 0.0
    %136 = vmatpush1.msra.mxu0 %v65
    %137 = vmatprep.subr.mxu0 0.0
    %138 = vmatpush1.msra.mxu0 0.0
    %139 = vmatprep.subr.mxu0 0.0
    %140 = vmatpush1.msra.mxu0 0.0
    %141 = vmatprep.subr.mxu0 0.0
    %142 = vmatpush1.msra.mxu0 0.0
    %143 = vmatprep.subr.mxu0 0.0
    %144 = vmatpush1.msra.mxu0 0.0
    %145 = vmatprep.subr.mxu0 0.0
    %146 = vmatpush1.msra.mxu0 0.0
    %147 = vmatprep.subr.mxu0 0.0
    %148 = vmatpush1.msra.mxu0 0.0
    %149 = vmatprep.subr.mxu0 0.0
    %150 = vmatpush1.msra.mxu0 0.0
    %151 = vmatprep.subr.mxu0 0.0
    %152 = vmatpush1.msra.mxu0 0.0
    %153 = vmatprep.subr.mxu0 0.0
    %154 = vmatpush1.msra.mxu0 0.0
    %155 = vmatprep.subr.mxu0 0.0
    %156 = vmatpush1.msra.mxu0 0.0
    %157 = vmatprep.subr.mxu0 0.0
    %158 = vmatpush1.msra.mxu0 0.0
    %159 = vmatprep.subr.mxu0 0.0
    %160 = vmatpush1.msra.mxu0 0.0
    %161 = vmatprep.subr.mxu0 0.0
    %162 = vmatpush1.msra.mxu0 0.0
    %163 = vmatprep.subr.mxu0 0.0
    %164 = vmatpush1.msra.mxu0 0.0
    %165 = vmatprep.subr.mxu0 0.0
    %166 = vmatpush1.msra.mxu0 0.0
    %167 = vmatprep.subr.mxu0 0.0
    %168 = vmatpush1.msra.mxu0 0.0
    %169 = vmatprep.mubr.f32.mxu0 0.0
    %170 = vmatmul.mubr.f32.gmra.mrb[0].mxu0 %v47
    %v171 = vpop.f32.mrb[0].mxu0
    %v172 = vadd.f32 %v104, %v171
    %v173 = vpop.f32.mrb[0].mxu0
    %174 = vmatprep.mubr.f32.mxu0 0.0
    %175 = vmatmul.mubr.f32.gmra.mrb[0].mxu0 %v48
    %v176 = vpop.f32.mrb[0].mxu0
    %v177 = vadd.f32 %v104, %v176
    %v178 = vpop.f32.mrb[0].mxu0
    %179 = vmatprep.mubr.f32.mxu0 0.0
    %180 = vmatmul.mubr.f32.gmra.mrb[0].mxu0 %v49
    %v181 = vpop.f32.mrb[0].mxu0
    %v182 = vadd.f32 %v104, %v181
    %v183 = vpop.f32.mrb[0].mxu0
    %184 = vdwg.mxu0
    %v185 = vmax.f32 %v172, 0.0
    %v186 = vmax.f32 %v177, 0.0
    %v187 = vmax.f32 %v182, 0.0
    %v188 = vlaneseq
    %v189 = vshrl.u32 %v188, 7
    %v190 = vsub.s32 0, %v189
    %v191 = vrot.slane %v99, %v190
    %192 = vmatprep.subr.mxu0 0.0
    %193 = vmatpush1.msra.mxu0 %v66
    %194 = vmatprep.subr.mxu0 0.0
    %195 = vmatpush1.msra.mxu0 %v67
    %196 = vmatprep.subr.mxu0 0.0
    %197 = vmatpush1.msra.mxu0 %v68
    %198 = vmatprep.subr.mxu0 0.0
    %199 = vmatpush1.msra.mxu0 %v69
    %200 = vmatprep.subr.mxu0 0.0
    %201 = vmatpush1.msra.mxu0 %v70
    %202 = vmatprep.subr.mxu0 0.0
    %203 = vmatpush1.msra.mxu0 %v71
    %204 = vmatprep.subr.mxu0 0.0
    %205 = vmatpush1.msra.mxu0 %v72
    %206 = vmatprep.subr.mxu0 0.0
    %207 = vmatpush1.msra.mxu0 %v73
    %208 = vmatprep.subr.mxu0 0.0
    %209 = vmatpush1.msra.mxu0 %v74
    %210 = vmatprep.subr.mxu0 0.0
    %211 = vmatpush1.msra.mxu0 %v75
    %212 = vmatprep.subr.mxu0 0.0
    %213 = vmatpush1.msra.mxu0 %v76
    %214 = vmatprep.subr.mxu0 0.0
    %215 = vmatpush1.msra.mxu0 %v77
    %216 = vmatprep.subr.mxu0 0.0
    %217 = vmatpush1.msra.mxu0 %v78
    %218 = vmatprep.subr.mxu0 0.0
    %219 = vmatpush1.msra.mxu0 %v79
    %220 = vmatprep.subr.mxu0 0.0
    %221 = vmatpush1.msra.mxu0 %v80
    %222 = vmatprep.subr.mxu0 0.0
    %223 = vmatpush1.msra.mxu0 %v81
    %224 = vmatprep.subr.mxu0 0.0
    %225 = vmatpush1.msra.mxu0 0.0
    %226 = vmatprep.subr.mxu0 0.0
    %227 = vmatpush1.msra.mxu0 0.0
    %228 = vmatprep.subr.mxu0 0.0
    %229 = vmatpush1.msra.mxu0 0.0
    %230 = vmatprep.subr.mxu0 0.0
    %231 = vmatpush1.msra.mxu0 0.0
    %232 = vmatprep.subr.mxu0 0.0
    %233 = vmatpush1.msra.mxu0 0.0
    %234 = vmatprep.subr.mxu0 0.0
    %235 = vmatpush1.msra.mxu0 0.0
    %236 = vmatprep.subr.mxu0 0.0
    %237 = vmatpush1.msra.mxu0 0.0
    %238 = vmatprep.subr.mxu0 0.0
    %239 = vmatpush1.msra.mxu0 0.0
    %240 = vmatprep.subr.mxu0 0.0
    %241 = vmatpush1.msra.mxu0 0.0
    %242 = vmatprep.subr.mxu0 0.0
    %243 = vmatpush1.msra.mxu0 0.0
    %244 = vmatprep.subr.mxu0 0.0
    %245 = vmatpush1.msra.mxu0 0.0
    %246 = vmatprep.subr.mxu0 0.0
    %247 = vmatpush1.msra.mxu0 0.0
    %248 = vmatprep.subr.mxu0 0.0
    %249 = vmatpush1.msra.mxu0 0.0
    %250 = vmatprep.subr.mxu0 0.0
    %251 = vmatpush1.msra.mxu0 0.0
    %252 = vmatprep.subr.mxu0 0.0
    %253 = vmatpush1.msra.mxu0 0.0
    %254 = vmatprep.subr.mxu0 0.0
    %255 = vmatpush1.msra.mxu0 0.0
    %256 = vmatprep.mubr.f32.mxu0 0.0
    %257 = vmatmul.mubr.f32.gmra.mrb[0].mxu0 %v185
    %v258 = vpop.f32.mrb[0].mxu0
    %v259 = vadd.f32 %v191, %v258
    %v260 = vpop.f32.mrb[0].mxu0
    %261 = vmatprep.mubr.f32.mxu0 0.0
    %262 = vmatmul.mubr.f32.gmra.mrb[0].mxu0 %v186
    %v263 = vpop.f32.mrb[0].mxu0
    %v264 = vadd.f32 %v191, %v263
    %v265 = vpop.f32.mrb[0].mxu0
    %266 = vmatprep.mubr.f32.mxu0 0.0
    %267 = vmatmul.mubr.f32.gmra.mrb[0].mxu0 %v187
    %v268 = vpop.f32.mrb[0].mxu0
    %v269 = vadd.f32 %v191, %v268
    %v270 = vpop.f32.mrb[0].mxu0
    %271 = vdwg.mxu0
    %v272 = vmax.f32 %v259, 0.0
    %v273 = vmax.f32 %v264, 0.0
    %v274 = vmax.f32 %v269, 0.0
    %v275 = vlaneseq
    %v276 = vshrl.u32 %v275, 7
    %v277 = vsub.s32 0, %v276
    %v278 = vrot.slane %v100, %v277
    %279 = vmatprep.subr.mxu0 0.0
    %280 = vmatpush1.msra.mxu0 %v82
    %281 = vmatprep.subr.mxu0 0.0
    %282 = vmatpush1.msra.mxu0 %v83
    %283 = vmatprep.subr.mxu0 0.0
    %284 = vmatpush1.msra.mxu0 %v84
    %285 = vmatprep.subr.mxu0 0.0
    %286 = vmatpush1.msra.mxu0 %v85
    %287 = vmatprep.subr.mxu0 0.0
    %288 = vmatpush1.msra.mxu0 %v86
    %289 = vmatprep.subr.mxu0 0.0
    %290 = vmatpush1.msra.mxu0 %v87
    %291 = vmatprep.subr.mxu0 0.0
    %292 = vmatpush1.msra.mxu0 %v88
    %293 = vmatprep.subr.mxu0 0.0
    %294 = vmatpush1.msra.mxu0 %v89
    %295 = vmatprep.subr.mxu0 0.0
    %296 = vmatpush1.msra.mxu0 %v90
    %297 = vmatprep.subr.mxu0 0.0
    %298 = vmatpush1.msra.mxu0 %v91
    %299 = vmatprep.subr.mxu0 0.0
    %300 = vmatpush1.msra.mxu0 %v92
    %301 = vmatprep.subr.mxu0 0.0
    %302 = vmatpush1.msra.mxu0 %v93
    %303 = vmatprep.subr.mxu0 0.0
    %304 = vmatpush1.msra.mxu0 %v94
    %305 = vmatprep.subr.mxu0 0.0
    %306 = vmatpush1.msra.mxu0 %v95
    %307 = vmatprep.subr.mxu0 0.0
    %308 = vmatpush1.msra.mxu0 %v96
    %309 = vmatprep.subr.mxu0 0.0
    %310 = vmatpush1.msra.mxu0 %v97
    %311 = vmatprep.subr.mxu0 0.0
    %312 = vmatpush1.msra.mxu0 0.0
    %313 = vmatprep.subr.mxu0 0.0
    %314 = vmatpush1.msra.mxu0 0.0
    %315 = vmatprep.subr.mxu0 0.0
    %316 = vmatpush1.msra.mxu0 0.0
    %317 = vmatprep.subr.mxu0 0.0
    %318 = vmatpush1.msra.mxu0 0.0
    %319 = vmatprep.subr.mxu0 0.0
    %320 = vmatpush1.msra.mxu0 0.0
    %321 = vmatprep.subr.mxu0 0.0
    %322 = vmatpush1.msra.mxu0 0.0
    %323 = vmatprep.subr.mxu0 0.0
    %324 = vmatpush1.msra.mxu0 0.0
    %325 = vmatprep.subr.mxu0 0.0
    %326 = vmatpush1.msra.mxu0 0.0
    %327 = vmatprep.subr.mxu0 0.0
    %328 = vmatpush1.msra.mxu0 0.0
    %329 = vmatprep.subr.mxu0 0.0
    %330 = vmatpush1.msra.mxu0 0.0
    %331 = vmatprep.subr.mxu0 0.0
    %332 = vmatpush1.msra.mxu0 0.0
    %333 = vmatprep.subr.mxu0 0.0
    %334 = vmatpush1.msra.mxu0 0.0
    %335 = vmatprep.subr.mxu0 0.0
    %336 = vmatpush1.msra.mxu0 0.0
    %337 = vmatprep.subr.mxu0 0.0
    %338 = vmatpush1.msra.mxu0 0.0
    %339 = vmatprep.subr.mxu0 0.0
    %340 = vmatpush1.msra.mxu0 0.0
    %341 = vmatprep.subr.mxu0 0.0
    %342 = vmatpush1.msra.mxu0 0.0
    %343 = vmatprep.mubr.f32.mxu0 0.0
    %344 = vmatmul.mubr.f32.gmra.mrb[0].mxu0 %v272
    %v345 = vpop.f32.mrb[0].mxu0
    %v346 = vadd.f32 %v278, %v345
    %v347 = vpop.f32.mrb[0].mxu0
    %348 = vmatprep.mubr.f32.mxu0 0.0
    %349 = vmatmul.mubr.f32.gmra.mrb[0].mxu0 %v273
    %v350 = vpop.f32.mrb[0].mxu0
    %v351 = vadd.f32 %v278, %v350
    %v352 = vpop.f32.mrb[0].mxu0
    %353 = vmatprep.mubr.f32.mxu0 0.0
    %354 = vmatmul.mubr.f32.gmra.mrb[0].mxu0 %v274
    %v355 = vpop.f32.mrb[0].mxu0
    %v356 = vadd.f32 %v278, %v355
    %v357 = vpop.f32.mrb[0].mxu0
    %358 = vdwg.mxu0
    %s359 = sld [smem:[#allocation3]]
    %v360 = vstv %s359
    %363 = vrot.lane.b32.xlu0 %v351, 64
    %v364 = vpop.permute.xlu0 %363
    %365 = vrot.lane.b32.xlu0 %v356, 64
    %v366 = vpop.permute.xlu0 %365
    %vm367 = vcmask 523264
    %v369 = vsel %vm367, %v346, 0
    %v371 = vsel %vm367, %v364, 0
    %v373 = vsel %vm367, %v366, 0
    %375 = vmatprep.subr.mxu0 0.0
    %376 = vmatpush1.xpose.msra.mxu0 %v371
    %377 = vmatprep.subr.mxu0 0.0
    %378 = vmatpush1.xpose.msra.mxu0 %v373
    %379 = vmatprep.subr.mxu0 0.0
    %380 = vmatpush1.xpose.msra.mxu0 0.0
    %381 = vmatprep.subr.mxu0 0.0
    %382 = vmatpush1.xpose.msra.mxu0 0.0
    %383 = vmatprep.subr.mxu0 0.0
    %384 = vmatpush1.xpose.msra.mxu0 0.0
    %385 = vmatprep.subr.mxu0 0.0
    %386 = vmatpush1.xpose.msra.mxu0 0.0
    %387 = vmatprep.subr.mxu0 0.0
    %388 = vmatpush1.xpose.msra.mxu0 0.0
    %389 = vmatprep.subr.mxu0 0.0
    %390 = vmatpush1.xpose.msra.mxu0 0.0
    %391 = vmatprep.subr.mxu0 0.0
    %392 = vmatpush1.xpose.msra.mxu0 0.0
    %393 = vmatprep.subr.mxu0 0.0
    %394 = vmatpush1.xpose.msra.mxu0 0.0
    %395 = vmatprep.subr.mxu0 0.0
    %396 = vmatpush1.xpose.msra.mxu0 0.0
    %397 = vmatprep.subr.mxu0 0.0
    %398 = vmatpush1.xpose.msra.mxu0 0.0
    %399 = vmatprep.subr.mxu0 0.0
    %400 = vmatpush1.xpose.msra.mxu0 0.0
    %401 = vmatprep.subr.mxu0 0.0
    %402 = vmatpush1.xpose.msra.mxu0 0.0
    %403 = vmatprep.subr.mxu0 0.0
    %404 = vmatpush1.xpose.msra.mxu0 0.0
    %405 = vmatprep.subr.mxu0 0.0
    %406 = vmatpush1.xpose.msra.mxu0 0.0
    %407 = vmatprep.subr.mxu0 0.0
    %408 = vmatpush1.xpose.msra.mxu0 0.0
    %409 = vmatprep.subr.mxu0 0.0
    %410 = vmatpush1.xpose.msra.mxu0 0.0
    %411 = vmatprep.subr.mxu0 0.0
    %412 = vmatpush1.xpose.msra.mxu0 0.0
    %413 = vmatprep.subr.mxu0 0.0
    %414 = vmatpush1.xpose.msra.mxu0 0.0
    %415 = vmatprep.subr.mxu0 0.0
    %416 = vmatpush1.xpose.msra.mxu0 0.0
    %417 = vmatprep.subr.mxu0 0.0
    %418 = vmatpush1.xpose.msra.mxu0 0.0
    %419 = vmatprep.subr.mxu0 0.0
    %420 = vmatpush1.xpose.msra.mxu0 0.0
    %421 = vmatprep.subr.mxu0 0.0
    %422 = vmatpush1.xpose.msra.mxu0 0.0
    %423 = vmatprep.subr.mxu0 0.0
    %424 = vmatpush1.xpose.msra.mxu0 0.0
    %425 = vmatprep.subr.mxu0 0.0
    %426 = vmatpush1.xpose.msra.mxu0 0.0
    %427 = vmatprep.subr.mxu0 0.0
    %428 = vmatpush1.xpose.msra.mxu0 0.0
    %429 = vmatprep.subr.mxu0 0.0
    %430 = vmatpush1.xpose.msra.mxu0 0.0
    %431 = vmatprep.subr.mxu0 0.0
    %432 = vmatpush1.xpose.msra.mxu0 0.0
    %433 = vmatprep.subr.mxu0 0.0
    %434 = vmatpush1.xpose.msra.mxu0 0.0
    %435 = vmatprep.subr.mxu0 0.0
    %436 = vmatpush1.xpose.msra.mxu0 0.0
    %437 = vmatprep.subr.mxu0 0.0
    %438 = vmatpush1.xpose.msra.mxu0 0.0
    %439 = vmatprep.mubr.f32.mxu0 0.0
    %440 = vmatmul.mubr.f32.gmra.mrb[0].mxu0 %v369
    %v441 = vpop.f32.mrb[0].mxu0
    %v442 = vadd.f32 %v360, %v441
    %v443 = vpop.f32.mrb[0].mxu0
    %444 = vdwg.mxu0
    %445 = vst.msk [vmem:[#allocation7] sm:$0xff] %vm40, %v442
    // Predicated region
    $region26: #{tpu_custom_call.1} parent=1 // pred_check
      _
    $region27: #{tpu_custom_call.1} parent=1 // pred_check_branch
      %447 = sbr.rel (0) target = $region29
    $region28: #{tpu_custom_call.1} parent=1 // pred_region
      %s449 = ssub.s32 128, 128
      %450 = vsyncadd [#allocation6], %s449
      %s452 = sshll.u32 [#allocation7], 4
      %s453 = int_to_ptr.vmem [resolvable:$true] %s452
      %455 = dma.vmem_to_hbm [thread:$0]  %s453, 128, %s5, [#allocation6]
    $region29: #{tpu_custom_call.1} parent=1 // pred_fallthru
      _
    // Predicated region
    $region30: #{tpu_custom_call.1} parent=1 // pred_check
      _
    $region31: #{tpu_custom_call.1} parent=1 // pred_check_branch
      %457 = sbr.rel (0) target = $region33
    $region32: #{tpu_custom_call.1} parent=1 // pred_region
      %458 = dma.done [#allocation6], 128
    $region33: #{tpu_custom_call.1} parent=1 // pred_fallthru
      _
    %459 = vsyncpa [#allocation5], 1
    %460 = vsyncpa [#allocation6], 1

</llo_original>
